<compile_context>
chip_gen: v7x
topology: tpu7x:2x2x1
jax: 0.10.0
libtpu: 0.0.40
codegen_flags: <defaults>
</compile_context>

<pallas_src>
import functools

import jax
import jax.numpy as jnp
from jax.experimental import pallas as pl
from jax.experimental.pallas import tpu as pltpu

LANES = 128


def _round_up(x, m):
    return ((x + m - 1) // m) * m


def _mish_kernel(x_ref, o_ref):
    x = x_ref[...].astype(jnp.float32)
    # tanh(softplus(x)) == t*(t+2) / (t*(t+2) + 2) with t = exp(x): exact
    # identity, 2 EUP transcendentals/elem (exp + reciprocal) instead of 3
    # (exp, log1p, tanh).
    t = jnp.exp(x)
    num = t * (t + 2.0)
    y = x * num * pl.reciprocal(num + 2.0, approx=False)
    # For x > 20, tanh(softplus(x)) == 1.0 to f32 precision and exp(x) may
    # overflow to inf (-> NaN in y); this single select handles both, so no
    # input clamp is needed.
    o_ref[...] = jnp.where(x > 20.0, x, y).astype(o_ref.dtype)


@functools.lru_cache(maxsize=None)
def _tiling_params():
    """Returns (block_bytes, vmem_limit_bytes) tuned per TPU generation."""
    block_bytes = 2 << 20   # ~86% of HBM roofline already at 1-2 MiB (v5e/v6e)
    vmem_limit = 32 << 20   # 4 double-buffered 2 MiB blocks (8 MiB) + headroom
    try:
        info = pltpu.get_tpu_info()
        vmem_cap = getattr(info, "vmem_capacity_bytes", None)
        if vmem_cap is not None and vmem_cap <= (64 << 20):
            # v7x-class: ~2.3x v6e HBM bandwidth but only 64 MiB VMEM per TC.
            # Bigger blocks amortize the ~0.35us per-grid-step overhead; keep
            # the scoped VMEM limit well under the physical 64 MiB.
            block_bytes = 4 << 20
            vmem_limit = 40 << 20
    except Exception:
        pass
    # Note: pipeline_mode=pl.Buffered(3) is a further few-percent option on
    # v7x once blocks are this large; default 2-deep buffering kept here.
    return block_bytes, vmem_limit


def mish(x, *, donate_input=False):
    """Elementwise Mish on an array of any shape (e.g. NCHW). Dtype-preserving.

    donate_input: set True only when the caller donates x's buffer; adds
    input_output_aliases={0: 0} so the op can run in place (same HBM traffic,
    but halves peak HBM footprint for large activation tensors).
    """
    orig_shape = x.shape
    orig_dtype = x.dtype
    n = x.size
    if n == 0:
        return x

    itemsize = jnp.dtype(orig_dtype).itemsize
    # Native sublane packing: 8 rows for 4-byte, 16 for 2-byte, 32 for 1-byte.
    min_rows = 8 * max(1, 4 // itemsize)

    rows = -(-n // LANES)  # rows of the lane-dense [rows, 128] slab
    block_bytes, vmem_limit = _tiling_params()
    target_rows = max(
        min_rows, (block_bytes // (LANES * itemsize)) // min_rows * min_rows
    )
    # Keep >= 2 grid steps whenever possible so the "parallel" grid axis lets
    # v7x's two TensorCores both stream (costs nothing on single-TC v5e/v6e).
    if rows > min_rows:
        target_rows = min(target_rows, _round_up(-(-rows // 2), min_rows))
    tile_rows = min(target_rows, _round_up(rows, min_rows))
    grid = (pl.cdiv(rows, tile_rows),)

    flat = x.reshape(-1)
    n_pad = rows * LANES - n
    if n_pad:
        # Ragged path (size % 128 != 0): pad only to the next lane multiple.
        # This still costs an extra HBM pass over the tensor.
        # TODO(synk): for hot ragged shapes, switch to memory_space=pl.ANY +
        # manual chunk DMA with a masked tail store instead of pad/slice.
        flat = jnp.pad(flat, (0, n_pad))
    slab = flat.reshape(rows, LANES)

    slab_bytes = rows * LANES * itemsize
    cost = pl.CostEstimate(
        flops=6 * n,
        transcendentals=2 * n,
        bytes_accessed=2 * slab_bytes,
    )

    out = pl.pallas_call(
        _mish_kernel,
        out_shape=jax.ShapeDtypeStruct((rows, LANES), orig_dtype),
        grid=grid,
        in_specs=[pl.BlockSpec((tile_rows, LANES), lambda i: (i, 0))],
        out_specs=pl.BlockSpec((tile_rows, LANES), lambda i: (i, 0)),
        compiler_params=pltpu.CompilerParams(
            dimension_semantics=("parallel",),
            vmem_limit_bytes=vmem_limit,
        ),
        cost_estimate=cost,
        input_output_aliases=({0: 0} if donate_input else {}),
    )(slab)

    out_flat = out.reshape(-1)
    if n_pad:
        out_flat = out_flat[:n]
    return out_flat.reshape(orig_shape)


def _mish_ref(x):
    xf = x.astype(jnp.float32)
    sp = jnp.maximum(xf, 0.0) + jnp.log1p(jnp.exp(-jnp.abs(xf)))
    return (xf * jnp.tanh(sp)).astype(x.dtype)


if __name__ == "__main__":
    key = jax.random.PRNGKey(0)
    k1, k2, k3 = jax.random.split(key, 3)

    # NCHW conv-style input. 2*4*16*16 = 2048 elems -> copy-free path, and the
    # >=2-grid-step rule splits it into two blocks.
    x = jax.random.normal(k1, (2, 4, 16, 16), dtype=jnp.float32) * 3.0
    # Exercise the large-x guard (incl. the exp-overflow branch) and deep tail.
    x = x.at[0, 0, 0, 0].set(30.0)
    x = x.at[0, 0, 0, 1].set(-40.0)
    x = x.at[0, 0, 0, 2].set(95.0)
    y = jax.block_until_ready(mish(x))
    y_ref = _mish_ref(x)
    assert y.shape == x.shape and y.dtype == x.dtype
    assert jnp.allclose(y, y_ref, atol=1e-5, rtol=1e-5)

    # Ragged size: exercises the pad path and the masked partial last block.
    x2 = jax.random.normal(k2, (3, 5, 7, 11), dtype=jnp.float32) * 3.0
    y2 = jax.block_until_ready(mish(x2))
    assert jnp.allclose(y2, _mish_ref(x2), atol=1e-5, rtol=1e-5)

    # bf16 input: byte-budget tiling keeps blocks large for 2-byte dtypes.
    x3 = (jax.random.normal(k3, (2, 8, 128), dtype=jnp.float32) * 3.0).astype(
        jnp.bfloat16
    )
    y3 = jax.block_until_ready(mish(x3))
    assert y3.shape == x3.shape and y3.dtype == jnp.bfloat16
    assert jnp.allclose(
        y3.astype(jnp.float32),
        _mish_ref(x3).astype(jnp.float32),
        atol=2e-2,
        rtol=2e-2,
    )

    print("KERNEL_OK")
</pallas_src>

<mosaic_0001>
module attributes {stable_mosaic.version = 11 : i64} {
  func.func @_mish_kernel(%arg0: i32, %arg1: memref<8x128xf32, #tpu.memory_space<vmem>>, %arg2: memref<8x128xf32, #tpu.memory_space<vmem>>) attributes {dimension_semantics = [#tpu.dimension_semantics<parallel>], iteration_bounds = array<i64: 2>, scalar_prefetch = 0 : i64, scratch_operands = 0 : i64, tpu.core_type = #tpu.core_type<tc>, window_params = [{transform_indices = @transform_0, window_bounds = array<i64: 8, 128>}, {transform_indices = @transform_1, window_bounds = array<i64: 8, 128>}]} {
    %c0 = arith.constant 0 : index
    %c0_0 = arith.constant 0 : index
    %0 = vector.load %arg1[%c0, %c0_0] : memref<8x128xf32, #tpu.memory_space<vmem>>, vector<8x128xf32>
    %1 = math.exp %0 : vector<8x128xf32>
    %cst = arith.constant 2.000000e+00 : f32
    %2 = vector.broadcast %cst : f32 to vector<8x128xf32>
    %3 = arith.addf %1, %2 : vector<8x128xf32>
    %4 = arith.mulf %1, %3 : vector<8x128xf32>
    %5 = arith.mulf %0, %4 : vector<8x128xf32>
    %cst_1 = arith.constant 2.000000e+00 : f32
    %6 = vector.broadcast %cst_1 : f32 to vector<8x128xf32>
    %7 = arith.addf %4, %6 : vector<8x128xf32>
    %8 = tpu.reciprocal %7 : vector<8x128xf32> -> vector<8x128xf32>
    %9 = arith.mulf %5, %8 : vector<8x128xf32>
    %cst_2 = arith.constant 2.000000e+01 : f32
    %10 = vector.broadcast %cst_2 : f32 to vector<8x128xf32>
    %11 = arith.cmpf ogt, %0, %10 : vector<8x128xf32>
    %12 = arith.select %11, %0, %9 : vector<8x128xi1>, vector<8x128xf32>
    %c0_3 = arith.constant 0 : index
    %c0_4 = arith.constant 0 : index
    %13 = vector.load %arg2[%c0_3, %c0_4] : memref<8x128xf32, #tpu.memory_space<vmem>>, vector<8x128xf32>
    tpu.vector_store %arg2[%c0_3, %c0_4], %12 {strides = array<i32>} : memref<8x128xf32, #tpu.memory_space<vmem>>, vector<8x128xf32>,
    return
  }
  func.func @transform_0(%arg0: i32) -> (i32, i32) {
    %c0_i32 = arith.constant 0 : i32
    %c0_i32_0 = arith.constant 0 : i32
    return %arg0, %c0_i32 : i32, i32
  }
  func.func @transform_1(%arg0: i32) -> (i32, i32) {
    %c0_i32 = arith.constant 0 : i32
    %c0_i32_0 = arith.constant 0 : i32
    return %arg0, %c0_i32 : i32, i32
  }
}

</mosaic_0001>

<llo_original>
// kernel: tpu_custom_call.1
$region0: #{tpu_custom_call.1}
  #allocation0 [shape = 'u32[]', space=smem, size = 0x4, offset = 0x4, fixed_abs, tag = 'smem constant byte address 0x4 - core index']
  #allocation1 [shape = 'u32[144,128]{1,0:T(1,128)}', space=vmem, size = 0x12000, scoped, tag = 'internal scratch']
  %s0 = inlined_call_operand.hbm [shape: f32[16,128], index: 0, kind: input, shape index: {}]
  %s1 = inlined_call_operand.hbm [shape: f32[16,128], index: 1, kind: output, shape index: {}]
  %s2 = sld [smem:[#allocation0]]
  $region41: #{tpu_custom_call.1} parent=0
    _
  %s4 = ssub.s32 1, %s2
  %s5 = scalar_select 0, %s4, %s2
  $region1: #{tpu_custom_call.1} parent=0
    #allocation2 [shape = 'u8[8192]{0}', space=vmem, size = 0x2000, scoped, tag = 'input window, operand 0']
    #allocation3 [shape = 's32[2]{0}', space=sflag, size = 0x8, scoped, tag = 'scoped memory for tpu_custom_call.1']
    #allocation4 [shape = 's32[2]{0}', space=sflag, size = 0x8, scoped, tag = 'scoped memory for tpu_custom_call.1']
    #allocation5 [shape = 'u8[8192]{0}', space=vmem, size = 0x2000, scoped, tag = 'output window, operand 0']
    %6 = vsyncpa [#allocation3], 0
    %s7 = scalar_lea.sflag [#allocation3], 1
    %8 = vsyncpa %s7, 0
    %9 = vsyncpa [#allocation4], 0
    %s10 = scalar_lea.sflag [#allocation4], 1
    %11 = vsyncpa %s10, 0
    loop: start=0, step=1, limit=4
    $region2: #{tpu_custom_call.1} parent=1 // loop_pre_header
      _
    $region3: #{tpu_custom_call.1} parent=1 // loop_header
      %s13 = sphi 0, %s17
      %p14 = scmp.ge.s32.totalorder %s13, 4
      %s23 = sphi 0, %s25
      %s26 = sphi 0, %s23
      %s27 = sphi 0, %s26
      %s43 = sphi 0, %s27
      %s49 = sphi 0, %s51
      %s52 = sphi 0, %s49
      %s53 = sphi 0, %s52
      %s69 = sphi 0, %s53
    $region4: #{tpu_custom_call.1} parent=1 // loop_header_branch
      %16 = sbr.rel (%p14) target = $region8
    $region5: #{tpu_custom_call.1} parent=1 // loop_body
      %s18 = ssub.s32 %s13, 1
      %s19 = ssub.s32 %s13, 2
      %s20 = sadd.s32 %s13, 1
      %s21 = ssub.s32 %s13, %s20
      %p22 = scmp.eq.s32.totalorder %s21, 0
      %s24 = sadd.s32 %s23, 1
      %s25 = scalar_select %p22, %s23, %s24
      %p28 = pneg %p22
      %p29 = scmp.eq.s32.totalorder %s13, 1
      %p30 = por %p28, %p29
      %p31 = scmp.ne.s32.totalorder %s23, %s26
      %p32 = scmp.eq.s32.totalorder %s13, 0
      %p33 = por %p31, %p32
      %p34 = scmp.ne.s32.totalorder %s23, %s26
      %p35 = scmp.eq.s32.totalorder %s18, 1
      %p36 = por %p34, %p35
      %p37 = scmp.ne.s32.totalorder %s26, %s27
      %p38 = scmp.eq.s32.totalorder %s18, 0
      %p39 = por %p37, %p38
      %p40 = scmp.ne.s32.totalorder %s26, %s27
      %p41 = scmp.eq.s32.totalorder %s19, 1
      %p42 = por %p40, %p41
      %p44 = scmp.ne.s32.totalorder %s27, %s43
      %p45 = scmp.eq.s32.totalorder %s19, 0
      %p46 = por %p44, %p45
      %s47 = ssub.s32 %s13, %s20
      %p48 = scmp.eq.s32.totalorder %s47, 0
      %s50 = sadd.s32 %s49, 1
      %s51 = scalar_select %p48, %s49, %s50
      %p54 = pneg %p48
      %p55 = scmp.eq.s32.totalorder %s13, 1
      %p56 = por %p54, %p55
      %p57 = scmp.ne.s32.totalorder %s49, %s52
      %p58 = scmp.eq.s32.totalorder %s13, 0
      %p59 = por %p57, %p58
      %p60 = scmp.ne.s32.totalorder %s49, %s52
      %p61 = scmp.eq.s32.totalorder %s18, 1
      %p62 = por %p60, %p61
      %p63 = scmp.ne.s32.totalorder %s52, %s53
      %p64 = scmp.eq.s32.totalorder %s18, 0
      %p65 = por %p63, %p64
      %p66 = scmp.ne.s32.totalorder %s52, %s53
      %p67 = scmp.eq.s32.totalorder %s19, 1
      %p68 = por %p66, %p67
      %p70 = scmp.ne.s32.totalorder %s53, %s69
      %p71 = scmp.eq.s32.totalorder %s19, 0
      %p72 = por %p70, %p71
      %p73 = scmp.le.s32.totalorder 1, %s13
      %p74 = scmp.lt.s32.totalorder %s13, 3
      %p75 = pnand %p73, %p74
      %p76 = pneg %p75
      // Predicated region
      $region9: #{tpu_custom_call.1} parent=5 // pred_check
        _
      $region10: #{tpu_custom_call.1} parent=5 // pred_check_branch
        %78 = sbr.rel (%p75) target = $region12
      $region11: #{tpu_custom_call.1} parent=5 // pred_region
        %s79 = ssub.s32 %s13, 1
      $region12: #{tpu_custom_call.1} parent=5 // pred_fallthru
        _
      %p80 = scmp.lt.s32.totalorder %s13, 2
      // Predicated region
      $region13: #{tpu_custom_call.1} parent=5 // pred_check
        %p81 = pneg %p80
      $region14: #{tpu_custom_call.1} parent=5 // pred_check_branch
        %83 = sbr.rel (%p81) target = $region16
      $region15: #{tpu_custom_call.1} parent=5 // pred_region
        // Predicated region
        $region17: #{tpu_custom_call.1} parent=15 // pred_check
          %p84 = pneg %p33
        $region18: #{tpu_custom_call.1} parent=15 // pred_check_branch
          %86 = sbr.rel (%p84) target = $region20
        $region19: #{tpu_custom_call.1} parent=15 // pred_region
          %s87 = sand.u32 %s23, 1
          %s88 = scalar_lea.sflag [#allocation3], %s87
          %s89 = sand.u32 %s23, 1
          %s90 = smul.addr %s89, 8
          %s91 = scalar_lea.vmem [#allocation2], %s90
          %s93 = ssub.s32 128, 128
          %94 = vsyncadd %s88, %s93
          %s95 = smul.addr %s13, 128
          %s96 = scalar_lea.hbm %s0, %s95
          %s98 = sshll.u32 %s91, 4
          %s99 = int_to_ptr.vmem [resolvable:$true] %s98
          %101 = dma.hbm_to_vmem [thread:$0]  %s96, 128, %s99, %s88
        $region20: #{tpu_custom_call.1} parent=15 // pred_fallthru
          _
      $region16: #{tpu_custom_call.1} parent=5 // pred_fallthru
        _
      %p102 = scmp.le.s32.totalorder 1, %s13
      %p103 = scmp.lt.s32.totalorder %s13, 3
      %p104 = pnand %p102, %p103
      %p105 = pneg %p104
      // Predicated region
      $region21: #{tpu_custom_call.1} parent=5 // pred_check
        _
      $region22: #{tpu_custom_call.1} parent=5 // pred_check_branch
        %107 = sbr.rel (%p104) target = $region24
      $region23: #{tpu_custom_call.1} parent=5 // pred_region
        %s108 = ssub.s32 %s13, 1
        %s109 = sand.u32 %s26, 1
        %s110 = scalar_lea.sflag [#allocation3], %s109
        %s111 = sand.u32 %s26, 1
        %s112 = smul.addr %s111, 8
        %s113 = scalar_lea.vmem [#allocation2], %s112
        // Predicated region
        $region25: #{tpu_custom_call.1} parent=23 // pred_check
          %p114 = pneg %p39
        $region26: #{tpu_custom_call.1} parent=23 // pred_check_branch
          %116 = sbr.rel (%p114) target = $region28
        $region27: #{tpu_custom_call.1} parent=23 // pred_region
          %117 = dma.done %s110, 128
        $region28: #{tpu_custom_call.1} parent=23 // pred_fallthru
          _
        %s118 = sand.u32 %s26, 1
        %s119 = scalar_lea.sflag [#allocation3], %s118
        %s120 = sand.u32 %s26, 1
        %s121 = smul.addr %s120, 8
        %s122 = scalar_lea.vmem [#allocation2], %s121
        %p123 = pneg %p39
        %p124 = pneg %p36
        %p125 = pneg %p65
        %p126 = pneg %p62
        %s127 = sand.u32 %s52, 1
        %s128 = scalar_lea.sflag [#allocation4], %s127
        %s129 = sand.u32 %s52, 1
        %s130 = smul.addr %s129, 8
        %s131 = scalar_lea.vmem [#allocation5], %s130
        %v132 = vld [vmem:[%s113] sm:$0xff]
        %v133 = vmul.f32 %v132, 1.442695
        %v134 = vpow.pop %v133
        %v135 = vadd.f32 %v134, 2.0
        %v136 = vmul.f32 %v134, %v135
        %v137 = vmul.f32 %v132, %v136
        %v138 = vadd.f32 %v136, 2.0
        %v139 = vrcp.pop %v138
        %v140 = vmul.f32 %v137, %v139
        %vm141 = vcmp.gt.f32.partialorder %v132, 20.0
        %v142 = vsel %vm141, %v132, %v140
        %143 = vst [vmem:[%s131] sm:$0xff] %v142
        %s144 = sand.u32 %s52, 1
        %s145 = scalar_lea.sflag [#allocation4], %s144
        %s146 = sand.u32 %s52, 1
        %s147 = smul.addr %s146, 8
        %s148 = scalar_lea.vmem [#allocation5], %s147
        // Predicated region
        $region29: #{tpu_custom_call.1} parent=23 // pred_check
          %p149 = pneg %p62
        $region30: #{tpu_custom_call.1} parent=23 // pred_check_branch
          %151 = sbr.rel (%p149) target = $region32
        $region31: #{tpu_custom_call.1} parent=23 // pred_region
          %s153 = ssub.s32 128, 128
          %154 = vsyncadd %s145, %s153
          %s155 = smul.addr %s18, 128
          %s156 = scalar_lea.hbm %s1, %s155
          %s158 = sshll.u32 %s148, 4
          %s159 = int_to_ptr.vmem [resolvable:$true] %s158
          %161 = dma.vmem_to_hbm [thread:$0]  %s159, 128, %s156, %s145
        $region32: #{tpu_custom_call.1} parent=23 // pred_fallthru
          _
      $region24: #{tpu_custom_call.1} parent=5 // pred_fallthru
        _
      %p162 = scmp.le.s32.totalorder 2, %s13
      // Predicated region
      $region33: #{tpu_custom_call.1} parent=5 // pred_check
        %p163 = pneg %p162
      $region34: #{tpu_custom_call.1} parent=5 // pred_check_branch
        %165 = sbr.rel (%p163) target = $region36
      $region35: #{tpu_custom_call.1} parent=5 // pred_region
        %s166 = ssub.s32 %s13, 2
        // Predicated region
        $region37: #{tpu_custom_call.1} parent=35 // pred_check
          %p167 = pneg %p68
        $region38: #{tpu_custom_call.1} parent=35 // pred_check_branch
          %169 = sbr.rel (%p167) target = $region40
        $region39: #{tpu_custom_call.1} parent=35 // pred_region
          %s170 = sand.u32 %s53, 1
          %s171 = scalar_lea.sflag [#allocation4], %s170
          %s172 = sand.u32 %s53, 1
          %s173 = smul.addr %s172, 8
          %s174 = scalar_lea.vmem [#allocation5], %s173
          %175 = dma.done %s171, 128
        $region40: #{tpu_custom_call.1} parent=35 // pred_fallthru
          _
      $region36: #{tpu_custom_call.1} parent=5 // pred_fallthru
        _
    $region6: #{tpu_custom_call.1} parent=1 // loop_footer
      %s17 = sadd.s32 1, %s13
    $region7: #{tpu_custom_call.1} parent=1 // loop_footer_branch
      %12 = sbr.rel target = $region3
    $region8: #{tpu_custom_call.1} parent=1 // loop_exit
      _
    %176 = vsyncpa [#allocation3], 1
    %s177 = scalar_lea.sflag [#allocation3], 1
    %178 = vsyncpa %s177, 1
    %179 = vsyncpa [#allocation4], 1
    %s180 = scalar_lea.sflag [#allocation4], 1
    %181 = vsyncpa %s180, 1

</llo_original>
